<compile_context>
chip_gen: v6e
topology: v6e:2x2x1
jax: 0.10.0
libtpu: 0.0.40
codegen_flags: <defaults>
</compile_context>

<pallas_src>
import jax
import jax.numpy as jnp
from jax.experimental import pallas as pl
from jax.experimental.pallas import tpu as pltpu


def _make_divisible(v, divisor, min_value=None):
    if min_value is None:
        min_value = divisor
    new_v = max(min_value, int(v + divisor / 2) // divisor * divisor)
    if new_v < 0.9 * v:
        new_v += divisor
    return new_v


def se_kernel(x_ref, w1_ref, b1_ref, w2_ref, b2_ref, o_ref):
    x = x_ref[...]                                            # (TB, C, HW)
    hw = x.shape[-1]

    # Global average pool over the lane-dense spatial axis; accumulate in f32
    # without materializing a full f32 copy of the block.
    y = jnp.sum(x, axis=-1, dtype=jnp.float32) * (1.0 / hw)   # (TB, C) f32

    # fc1 + ReLU on the MXU: (TB, C) @ (C, Hd) -> (TB, Hd).
    h = jnp.dot(y, w1_ref[...], preferred_element_type=jnp.float32) + b1_ref[...]
    h = jnp.maximum(h, 0.0)

    # fc2 + h_sigmoid (relu6(s + 3) / 6) on the MXU: (TB, Hd) @ (Hd, C) -> (TB, C).
    s = jnp.dot(h, w2_ref[...], preferred_element_type=jnp.float32) + b2_ref[...]
    s = jnp.clip(s + 3.0, 0.0, 6.0) * (1.0 / 6.0)             # (TB, C) f32

    # Channel-wise rescale, broadcast over the spatial (lane) axis.
    o_ref[...] = (x * s[:, :, None].astype(x.dtype)).astype(o_ref.dtype)


def se_layer(x, w1, b1, w2, b2):
    B, C, H, W = x.shape
    HW = H * W
    hidden = w1.shape[1]

    # Lane-dense layout: collapse H, W (metadata-only reshape, free).
    x3 = x.reshape(B, C, HW)

    # --- Batch-tile sizing -------------------------------------------------
    # ~6 MiB per x block => ~24 MiB resident with double-buffered input +
    # output blocks: lands on the measured HBM-roofline plateau on v6e/v7x
    # while staying well under v7x's 64 MiB physical VMEM.
    itemsize = jnp.dtype(x.dtype).itemsize
    bytes_per_sample = C * HW * itemsize
    budget = 6 * 1024 * 1024
    TB = int(max(1, min(B, budget // max(1, bytes_per_sample))))

    # Keep >= 4 grid steps when possible so both v7x TensorCores get >= 2
    # pipelined steps (and v5e/v6e keep DMA/compute overlap).
    if B >= 4:
        TB = min(TB, pl.cdiv(B, 4))
    # Sublane-aligned SE intermediates: TB on the sublane axis of (TB, C).
    if TB >= 8:
        TB = (TB // 8) * 8
    TB = max(1, TB)

    # Explicit VMEM limit: 4x block (double-buffered in + out) plus slack.
    # Covers the TB=1 fallback for very large per-sample footprints.
    block_bytes = TB * bytes_per_sample
    vmem_limit = int(min(100 * 2**20, max(48 * 2**20, 4 * block_bytes + 4 * 2**20)))

    out3 = pl.pallas_call(
        se_kernel,
        out_shape=jax.ShapeDtypeStruct((B, C, HW), x.dtype),
        grid=(pl.cdiv(B, TB),),                               # ragged last block is OK
        in_specs=[
            pl.BlockSpec((TB, C, HW), lambda i: (i, 0, 0)),   # x tile
            pl.BlockSpec((C, hidden), lambda i: (0, 0)),      # w1 (resident)
            pl.BlockSpec((1, hidden), lambda i: (0, 0)),      # b1 (resident)
            pl.BlockSpec((hidden, C), lambda i: (0, 0)),      # w2 (resident)
            pl.BlockSpec((1, C), lambda i: (0, 0)),           # b2 (resident)
        ],
        out_specs=pl.BlockSpec((TB, C, HW), lambda i: (i, 0, 0)),
        compiler_params=pltpu.CompilerParams(
            dimension_semantics=("parallel",),                # v7x 2-TC sharding
            vmem_limit_bytes=vmem_limit,
        ),
    )(x3, w1, b1, w2, b2)

    return out3.reshape(B, C, H, W)


def se_layer_reference(x, w1, b1, w2, b2):
    """Pure-JAX reference for sanity checking."""
    y = jnp.mean(x, axis=(2, 3))
    h = jnp.maximum(y @ w1 + b1, 0.0)
    s = jnp.clip(h @ w2 + b2 + 3.0, 0.0, 6.0) / 6.0
    return x * s[:, :, None, None]


if __name__ == "__main__":
    B, C, H, W = 2, 16, 16, 16
    reduction = 4
    hidden = _make_divisible(C // reduction, 8)               # = 8

    key = jax.random.PRNGKey(0)
    kx, k1, k2, k3, k4 = jax.random.split(key, 5)

    x = jax.random.normal(kx, (B, C, H, W), dtype=jnp.float32)

    # Deterministic synthetic parameters (shapes follow nn.Linear in __init__,
    # stored transposed as (in, out)).
    w1 = jax.random.normal(k1, (C, hidden), dtype=jnp.float32) * 0.1   # fc1 weight
    b1 = jax.random.normal(k2, (1, hidden), dtype=jnp.float32) * 0.1   # fc1 bias
    w2 = jax.random.normal(k3, (hidden, C), dtype=jnp.float32) * 0.1   # fc2 weight
    b2 = jax.random.normal(k4, (1, C), dtype=jnp.float32) * 0.1        # fc2 bias

    out = se_layer(x, w1, b1, w2, b2)
    out = jax.block_until_ready(out)

    ref = se_layer_reference(x, w1, b1, w2, b2)
    assert out.shape == x.shape and out.dtype == x.dtype
    assert jnp.allclose(out, ref, atol=1e-5, rtol=1e-5)

    print("KERNEL_OK")
</pallas_src>

<mosaic_0001>
module attributes {stable_mosaic.version = 11 : i64} {
  func.func @se_kernel(%arg0: i32, %arg1: memref<2x16x256xf32, #tpu.memory_space<vmem>>, %arg2: memref<16x8xf32, #tpu.memory_space<vmem>>, %arg3: memref<1x8xf32, #tpu.memory_space<vmem>>, %arg4: memref<8x16xf32, #tpu.memory_space<vmem>>, %arg5: memref<1x16xf32, #tpu.memory_space<vmem>>, %arg6: memref<2x16x256xf32, #tpu.memory_space<vmem>>) attributes {dimension_semantics = [#tpu.dimension_semantics<parallel>], iteration_bounds = array<i64: 1>, scalar_prefetch = 0 : i64, scratch_operands = 0 : i64, tpu.core_type = #tpu.core_type<tc>, window_params = [{transform_indices = @transform_0, window_bounds = array<i64: 2, 16, 256>}, {pipeline_mode = #tpu.pipeline_mode<synchronous>, transform_indices = @transform_1, window_bounds = array<i64: 16, 8>}, {pipeline_mode = #tpu.pipeline_mode<synchronous>, transform_indices = @transform_2, window_bounds = array<i64: 1, 8>}, {pipeline_mode = #tpu.pipeline_mode<synchronous>, transform_indices = @transform_3, window_bounds = array<i64: 8, 16>}, {pipeline_mode = #tpu.pipeline_mode<synchronous>, transform_indices = @transform_4, window_bounds = array<i64: 1, 16>}, {transform_indices = @transform_5, window_bounds = array<i64: 2, 16, 256>}]} {
    %c0 = arith.constant 0 : index
    %c0_0 = arith.constant 0 : index
    %c0_1 = arith.constant 0 : index
    %0 = vector.load %arg1[%c0, %c0_0, %c0_1] : memref<2x16x256xf32, #tpu.memory_space<vmem>>, vector<2x16x256xf32>
    %cst = arith.constant dense<0.000000e+00> : vector<2x16xf32>
    %1 = vector.multi_reduction <add>, %0, %cst [2] : vector<2x16x256xf32> to vector<2x16xf32>
    %cst_2 = arith.constant 3.906250e-03 : f32
    %2 = vector.broadcast %cst_2 : f32 to vector<2x16xf32>
    %3 = arith.mulf %1, %2 : vector<2x16xf32>
    %c0_3 = arith.constant 0 : index
    %c0_4 = arith.constant 0 : index
    %4 = vector.load %arg2[%c0_3, %c0_4] : memref<16x8xf32, #tpu.memory_space<vmem>>, vector<16x8xf32>
    %cst_5 = arith.constant dense<0.000000e+00> : vector<2x8xf32>
    %5 = tpu.matmul %3, %4, %cst_5 {dimension_numbers = #tpu.dot_dimension_numbers<[1], [0], [0], [1], [0, 0, 1, 1], [], []>} : vector<2x16xf32>, vector<16x8xf32>, vector<2x8xf32> -> vector<2x8xf32>
    %c0_6 = arith.constant 0 : index
    %c0_7 = arith.constant 0 : index
    %6 = vector.load %arg3[%c0_6, %c0_7] : memref<1x8xf32, #tpu.memory_space<vmem>>, vector<1x8xf32>
    %7 = vector.broadcast %6 : vector<1x8xf32> to vector<2x8xf32>
    %8 = arith.addf %5, %7 : vector<2x8xf32>
    %cst_8 = arith.constant 0.000000e+00 : f32
    %9 = vector.broadcast %cst_8 : f32 to vector<2x8xf32>
    %10 = arith.maximumf %8, %9 : vector<2x8xf32>
    %c0_9 = arith.constant 0 : index
    %c0_10 = arith.constant 0 : index
    %11 = vector.load %arg4[%c0_9, %c0_10] : memref<8x16xf32, #tpu.memory_space<vmem>>, vector<8x16xf32>
    %cst_11 = arith.constant dense<0.000000e+00> : vector<2x16xf32>
    %12 = tpu.matmul %10, %11, %cst_11 {dimension_numbers = #tpu.dot_dimension_numbers<[1], [0], [0], [1], [0, 0, 1, 1], [], []>} : vector<2x8xf32>, vector<8x16xf32>, vector<2x16xf32> -> vector<2x16xf32>
    %c0_12 = arith.constant 0 : index
    %c0_13 = arith.constant 0 : index
    %13 = vector.load %arg5[%c0_12, %c0_13] : memref<1x16xf32, #tpu.memory_space<vmem>>, vector<1x16xf32>
    %14 = vector.broadcast %13 : vector<1x16xf32> to vector<2x16xf32>
    %15 = arith.addf %12, %14 : vector<2x16xf32>
    %cst_14 = arith.constant 3.000000e+00 : f32
    %16 = vector.broadcast %cst_14 : f32 to vector<2x16xf32>
    %17 = arith.addf %15, %16 : vector<2x16xf32>
    %cst_15 = arith.constant 0.000000e+00 : f32
    %cst_16 = arith.constant 6.000000e+00 : f32
    %18 = vector.broadcast %cst_15 : f32 to vector<2x16xf32>
    %19 = arith.maximumf %18, %17 : vector<2x16xf32>
    %20 = vector.broadcast %cst_16 : f32 to vector<2x16xf32>
    %21 = arith.minimumf %20, %19 : vector<2x16xf32>
    %cst_17 = arith.constant 0.166666672 : f32
    %22 = vector.broadcast %cst_17 : f32 to vector<2x16xf32>
    %23 = arith.mulf %21, %22 : vector<2x16xf32>
    %24 = vector.shape_cast %23 : vector<2x16xf32> to vector<2x16x1xf32>
    %25 = vector.broadcast %24 : vector<2x16x1xf32> to vector<2x16x256xf32>
    %26 = arith.mulf %0, %25 : vector<2x16x256xf32>
    %c0_18 = arith.constant 0 : index
    %c0_19 = arith.constant 0 : index
    %c0_20 = arith.constant 0 : index
    %27 = vector.load %arg6[%c0_18, %c0_19, %c0_20] : memref<2x16x256xf32, #tpu.memory_space<vmem>>, vector<2x16x256xf32>
    tpu.vector_store %arg6[%c0_18, %c0_19, %c0_20], %26 {strides = array<i32>} : memref<2x16x256xf32, #tpu.memory_space<vmem>>, vector<2x16x256xf32>,
    return
  }
  func.func @transform_0(%arg0: i32) -> (i32, i32, i32) {
    %c0_i32 = arith.constant 0 : i32
    %c0_i32_0 = arith.constant 0 : i32
    %c0_i32_1 = arith.constant 0 : i32
    return %arg0, %c0_i32, %c0_i32_0 : i32, i32, i32
  }
  func.func @transform_1(%arg0: i32) -> (i32, i32) {
    %c0_i32 = arith.constant 0 : i32
    %c0_i32_0 = arith.constant 0 : i32
    %c0_i32_1 = arith.constant 0 : i32
    return %c0_i32, %c0_i32_0 : i32, i32
  }
  func.func @transform_2(%arg0: i32) -> (i32, i32) {
    %c0_i32 = arith.constant 0 : i32
    %c0_i32_0 = arith.constant 0 : i32
    %c0_i32_1 = arith.constant 0 : i32
    return %c0_i32, %c0_i32_0 : i32, i32
  }
  func.func @transform_3(%arg0: i32) -> (i32, i32) {
    %c0_i32 = arith.constant 0 : i32
    %c0_i32_0 = arith.constant 0 : i32
    %c0_i32_1 = arith.constant 0 : i32
    return %c0_i32, %c0_i32_0 : i32, i32
  }
  func.func @transform_4(%arg0: i32) -> (i32, i32) {
    %c0_i32 = arith.constant 0 : i32
    %c0_i32_0 = arith.constant 0 : i32
    %c0_i32_1 = arith.constant 0 : i32
    return %c0_i32, %c0_i32_0 : i32, i32
  }
  func.func @transform_5(%arg0: i32) -> (i32, i32, i32) {
    %c0_i32 = arith.constant 0 : i32
    %c0_i32_0 = arith.constant 0 : i32
    %c0_i32_1 = arith.constant 0 : i32
    return %arg0, %c0_i32, %c0_i32_0 : i32, i32, i32
  }
}

</mosaic_0001>

<llo_original>
// kernel: tpu_custom_call.1
$region0: #{tpu_custom_call.1}
  #allocation0 [shape = 'u32[]', space=smem, size = 0x4, offset = 0x4, fixed_abs, tag = 'smem constant byte address 0x4 - core index']
  #allocation1 [shape = 'u32[144,128]{1,0:T(1,128)}', space=vmem, size = 0x12000, scoped, tag = 'internal scratch']
  %s0 = inlined_call_operand.hbm [shape: f32[2,16,256], index: 0, kind: input, shape index: {}]
  %s1 = inlined_call_operand.vmem [shape: f32[16,8], index: 1, kind: input, shape index: {}]
  %s2 = inlined_call_operand.vmem [shape: f32[1,8], index: 2, kind: input, shape index: {}]
  %s3 = inlined_call_operand.vmem [shape: f32[8,16], index: 3, kind: input, shape index: {}]
  %s4 = inlined_call_operand.vmem [shape: f32[1,16], index: 4, kind: input, shape index: {}]
  %s5 = inlined_call_operand.hbm [shape: f32[2,16,256], index: 5, kind: output, shape index: {}]
  %s6 = sld [smem:[#allocation0]]
  $region34: #{tpu_custom_call.1} parent=0
    _
  %s8 = ssub.s32 1, %s6
  %s9 = scalar_select 0, %s8, %s6
  $region1: #{tpu_custom_call.1} parent=0
    #allocation2 [shape = 'u8[32768]{0}', space=vmem, size = 0x8000, scoped, tag = 'input window, operand 0, single buffered']
    #allocation3 [shape = 's32[1]{0}', space=sflag, size = 0x4, scoped, tag = 'scoped memory for tpu_custom_call.1']
    #allocation4 [shape = 's32[1]{0}', space=sflag, size = 0x4, scoped, tag = 'scoped memory for tpu_custom_call.1']
    #allocation5 [shape = 'u8[32768]{0}', space=vmem, size = 0x8000, scoped, tag = 'output window, operand 0, single buffered']
    %10 = vsyncpa [#allocation3], 0
    %11 = vsyncpa [#allocation4], 0
    // Predicated region
    $region2: #{tpu_custom_call.1} parent=1 // pred_check
      _
    $region3: #{tpu_custom_call.1} parent=1 // pred_check_branch
      %13 = sbr.rel (0) target = $region5
    $region4: #{tpu_custom_call.1} parent=1 // pred_region
      %s15 = ssub.s32 1024, 1024
      %16 = vsyncadd [#allocation3], %s15
      %s17 = sshll.u32 [#allocation2], 4
      %s18 = int_to_ptr.vmem [resolvable:$true] %s17
      %23 = dma.hbm_to_vmem [thread:$0]  %s0, 1024, %s18, [#allocation3], 256, 256, 16
    $region5: #{tpu_custom_call.1} parent=1 // pred_fallthru
      _
    // Predicated region
    $region6: #{tpu_custom_call.1} parent=1 // pred_check
      _
    $region7: #{tpu_custom_call.1} parent=1 // pred_check_branch
      %25 = sbr.rel (0) target = $region9
    $region8: #{tpu_custom_call.1} parent=1 // pred_region
      _
    $region9: #{tpu_custom_call.1} parent=1 // pred_fallthru
      _
    // Predicated region
    $region10: #{tpu_custom_call.1} parent=1 // pred_check
      _
    $region11: #{tpu_custom_call.1} parent=1 // pred_check_branch
      %27 = sbr.rel (0) target = $region13
    $region12: #{tpu_custom_call.1} parent=1 // pred_region
      _
    $region13: #{tpu_custom_call.1} parent=1 // pred_fallthru
      _
    // Predicated region
    $region14: #{tpu_custom_call.1} parent=1 // pred_check
      _
    $region15: #{tpu_custom_call.1} parent=1 // pred_check_branch
      %29 = sbr.rel (0) target = $region17
    $region16: #{tpu_custom_call.1} parent=1 // pred_region
      _
    $region17: #{tpu_custom_call.1} parent=1 // pred_fallthru
      _
    // Predicated region
    $region18: #{tpu_custom_call.1} parent=1 // pred_check
      _
    $region19: #{tpu_custom_call.1} parent=1 // pred_check_branch
      %31 = sbr.rel (0) target = $region21
    $region20: #{tpu_custom_call.1} parent=1 // pred_region
      _
    $region21: #{tpu_custom_call.1} parent=1 // pred_fallthru
      _
    // Predicated region
    $region22: #{tpu_custom_call.1} parent=1 // pred_check
      _
    $region23: #{tpu_custom_call.1} parent=1 // pred_check_branch
      %33 = sbr.rel (0) target = $region25
    $region24: #{tpu_custom_call.1} parent=1 // pred_region
      %34 = dma.done [#allocation3], 1024
    $region25: #{tpu_custom_call.1} parent=1 // pred_fallthru
      _
    %v35 = vld [vmem:[#allocation2] sm:$0xff]
    %v36 = vld [vmem:[#allocation2 + $0x8] sm:$0xff]
    %v37 = vld [vmem:[#allocation2 + $0x10] sm:$0xff]
    %v38 = vld [vmem:[#allocation2 + $0x18] sm:$0xff]
    %v39 = vld [vmem:[#allocation2 + $0x20] sm:$0xff]
    %v40 = vld [vmem:[#allocation2 + $0x28] sm:$0xff]
    %v41 = vld [vmem:[#allocation2 + $0x30] sm:$0xff]
    %v42 = vld [vmem:[#allocation2 + $0x38] sm:$0xff]
    %v43 = vadd.f32 %v35, %v36
    %44 = vadd.xlane.f32.xlu0 %v43
    %v45 = vpop.xlane.xlu0 %44
    %v46 = vadd.f32 %v37, %v38
    %47 = vadd.xlane.f32.xlu0 %v46
    %v48 = vpop.xlane.xlu0 %47
    %v49 = vadd.f32 %v39, %v40
    %50 = vadd.xlane.f32.xlu0 %v49
    %v51 = vpop.xlane.xlu0 %50
    %v52 = vadd.f32 %v41, %v42
    %53 = vadd.xlane.f32.xlu0 %v52
    %v54 = vpop.xlane.xlu0 %53
    %v55 = vmul.f32 %v45, 0.00390625
    %v56 = vmul.f32 %v48, 0.00390625
    %v57 = vmul.f32 %v51, 0.00390625
    %v58 = vmul.f32 %v54, 0.00390625
    %v59 = vld [vmem:[%s1] sm:$0xff]
    %v60 = vld [vmem:[%s1 + $0x8] sm:$0xff]
    %v61 = vld [vmem:[%s2] sm:$0x1]
    %v63 = vlaneseq
    %v64 = vshrl.u32 %v63, 7
    %v65 = vsub.s32 0, %v64
    %v66 = vrot.slane %v61, %v65
    %v72 = vlaneseq
    %v73 = vand.u32 %v72, 127
    %v74 = vlaneseq
    %v75 = vshrl.u32 %v74, 7
    %v76 = vsub.s32 %v73, %v75
    %v77 = vrot.slane %v55, %v76
    %v78 = vadd.s32 %v73, 4294967288
    %v79 = vlaneseq
    %v80 = vshrl.u32 %v79, 7
    %v81 = vsub.s32 %v78, %v80
    %v82 = vrot.slane %v56, %v81
    %vm83 = vcmask 130112
    %v84 = vsel %vm83, %v82, %v77
    %v85 = vlaneseq
    %v86 = vshrl.u32 %v85, 7
    %v87 = vsub.s32 %v73, %v86
    %v88 = vrot.slane %v57, %v87
    %v89 = vlaneseq
    %v90 = vshrl.u32 %v89, 7
    %v91 = vsub.s32 %v78, %v90
    %v92 = vrot.slane %v58, %v91
    %v93 = vsel %vm83, %v92, %v88
    %vm94 = vcmask 1041409
    %v95 = vsel %vm94, %v93, %v84
    %vm96 = vcmask 130048
    %v97 = vsel %vm96, %v95, 0
    %99 = vmatprep.subr.mxu0 0.0
    %100 = vmatpush1.msra.mxu0 0.0
    %101 = vmatprep.subr.mxu0 0.0
    %102 = vmatpush1.msra.mxu0 0.0
    %103 = vmatprep.subr.mxu0 0.0
    %104 = vmatpush1.msra.mxu0 0.0
    %105 = vmatprep.subr.mxu0 0.0
    %106 = vmatpush1.msra.mxu0 0.0
    %107 = vmatprep.subr.mxu0 0.0
    %108 = vmatpush1.msra.mxu0 0.0
    %109 = vmatprep.subr.mxu0 0.0
    %110 = vmatpush1.msra.mxu0 0.0
    %111 = vmatprep.subr.mxu0 0.0
    %112 = vmatpush1.msra.mxu0 0.0
    %113 = vmatprep.subr.mxu0 0.0
    %114 = vmatpush1.msra.mxu0 0.0
    %115 = vmatprep.subr.mxu0 0.0
    %116 = vmatpush1.msra.mxu0 0.0
    %117 = vmatprep.subr.mxu0 0.0
    %118 = vmatpush1.msra.mxu0 0.0
    %119 = vmatprep.subr.mxu0 0.0
    %120 = vmatpush1.msra.mxu0 0.0
    %121 = vmatprep.subr.mxu0 0.0
    %122 = vmatpush1.msra.mxu0 0.0
    %123 = vmatprep.subr.mxu0 0.0
    %124 = vmatpush1.msra.mxu0 0.0
    %125 = vmatprep.subr.mxu0 0.0
    %126 = vmatpush1.msra.mxu0 0.0
    %127 = vmatprep.subr.mxu0 0.0
    %128 = vmatpush1.msra.mxu0 %v60
    %129 = vmatprep.subr.mxu0 0.0
    %130 = vmatpush1.msra.mxu0 %v59
    %131 = vmatprep.subr.mxu0 0.0
    %132 = vmatpush2.msra.mxu0 0.0
    %133 = vmatprep.subr.mxu0 0.0
    %134 = vmatpush2.msra.mxu0 0.0
    %135 = vmatprep.subr.mxu0 0.0
    %136 = vmatpush2.msra.mxu0 0.0
    %137 = vmatprep.subr.mxu0 0.0
    %138 = vmatpush2.msra.mxu0 0.0
    %139 = vmatprep.subr.mxu0 0.0
    %140 = vmatpush2.msra.mxu0 0.0
    %141 = vmatprep.subr.mxu0 0.0
    %142 = vmatpush2.msra.mxu0 0.0
    %143 = vmatprep.subr.mxu0 0.0
    %144 = vmatpush2.msra.mxu0 0.0
    %145 = vmatprep.subr.mxu0 0.0
    %146 = vmatpush2.msra.mxu0 0.0
    %147 = vmatprep.subr.mxu0 0.0
    %148 = vmatpush2.msra.mxu0 0.0
    %149 = vmatprep.subr.mxu0 0.0
    %150 = vmatpush2.msra.mxu0 0.0
    %151 = vmatprep.subr.mxu0 0.0
    %152 = vmatpush2.msra.mxu0 0.0
    %153 = vmatprep.subr.mxu0 0.0
    %154 = vmatpush2.msra.mxu0 0.0
    %155 = vmatprep.subr.mxu0 0.0
    %156 = vmatpush2.msra.mxu0 0.0
    %157 = vmatprep.subr.mxu0 0.0
    %158 = vmatpush2.msra.mxu0 0.0
    %159 = vmatprep.subr.mxu0 0.0
    %160 = vmatpush2.msra.mxu0 0.0
    %161 = vmatprep.subr.mxu0 0.0
    %162 = vmatpush2.msra.mxu0 0.0
    %163 = vmatprep.mubr.f32.mxu0 0.0
    %164 = vmatmul.mubr.f32.gmra.mxu0 %v97
    %v165 = vpop.f32.mrf.mxu0
    %v166 = vadd.f32 %v66, %v165
    %v167 = vpop.f32.mrf.mxu0
    %168 = vdwg.mxu0
    %v169 = vmax.f32 %v166, 0.0
    %v170 = vld [vmem:[%s3] sm:$0xff]
    %v171 = vld [vmem:[%s4] sm:$0x1]
    %v173 = vlaneseq
    %v174 = vshrl.u32 %v173, 7
    %v175 = vsub.s32 0, %v174
    %v176 = vrot.slane %v171, %v175
    %vm178 = vcmask 64512
    %v180 = vsel %vm178, %v169, 0
    %182 = vmatprep.subr.mxu0 0.0
    %183 = vmatpush1.msra.mxu0 0.0
    %184 = vmatprep.subr.mxu0 0.0
    %185 = vmatpush1.msra.mxu0 0.0
    %186 = vmatprep.subr.mxu0 0.0
    %187 = vmatpush1.msra.mxu0 0.0
    %188 = vmatprep.subr.mxu0 0.0
    %189 = vmatpush1.msra.mxu0 0.0
    %190 = vmatprep.subr.mxu0 0.0
    %191 = vmatpush1.msra.mxu0 0.0
    %192 = vmatprep.subr.mxu0 0.0
    %193 = vmatpush1.msra.mxu0 0.0
    %194 = vmatprep.subr.mxu0 0.0
    %195 = vmatpush1.msra.mxu0 0.0
    %196 = vmatprep.subr.mxu0 0.0
    %197 = vmatpush1.msra.mxu0 0.0
    %198 = vmatprep.subr.mxu0 0.0
    %199 = vmatpush1.msra.mxu0 0.0
    %200 = vmatprep.subr.mxu0 0.0
    %201 = vmatpush1.msra.mxu0 0.0
    %202 = vmatprep.subr.mxu0 0.0
    %203 = vmatpush1.msra.mxu0 0.0
    %204 = vmatprep.subr.mxu0 0.0
    %205 = vmatpush1.msra.mxu0 0.0
    %206 = vmatprep.subr.mxu0 0.0
    %207 = vmatpush1.msra.mxu0 0.0
    %208 = vmatprep.subr.mxu0 0.0
    %209 = vmatpush1.msra.mxu0 0.0
    %210 = vmatprep.subr.mxu0 0.0
    %211 = vmatpush1.msra.mxu0 0.0
    %212 = vmatprep.subr.mxu0 0.0
    %213 = vmatpush1.msra.mxu0 %v170
    %214 = vmatprep.subr.mxu0 0.0
    %215 = vmatpush2.msra.mxu0 0.0
    %216 = vmatprep.subr.mxu0 0.0
    %217 = vmatpush2.msra.mxu0 0.0
    %218 = vmatprep.subr.mxu0 0.0
    %219 = vmatpush2.msra.mxu0 0.0
    %220 = vmatprep.subr.mxu0 0.0
    %221 = vmatpush2.msra.mxu0 0.0
    %222 = vmatprep.subr.mxu0 0.0
    %223 = vmatpush2.msra.mxu0 0.0
    %224 = vmatprep.subr.mxu0 0.0
    %225 = vmatpush2.msra.mxu0 0.0
    %226 = vmatprep.subr.mxu0 0.0
    %227 = vmatpush2.msra.mxu0 0.0
    %228 = vmatprep.subr.mxu0 0.0
    %229 = vmatpush2.msra.mxu0 0.0
    %230 = vmatprep.subr.mxu0 0.0
    %231 = vmatpush2.msra.mxu0 0.0
    %232 = vmatprep.subr.mxu0 0.0
    %233 = vmatpush2.msra.mxu0 0.0
    %234 = vmatprep.subr.mxu0 0.0
    %235 = vmatpush2.msra.mxu0 0.0
    %236 = vmatprep.subr.mxu0 0.0
    %237 = vmatpush2.msra.mxu0 0.0
    %238 = vmatprep.subr.mxu0 0.0
    %239 = vmatpush2.msra.mxu0 0.0
    %240 = vmatprep.subr.mxu0 0.0
    %241 = vmatpush2.msra.mxu0 0.0
    %242 = vmatprep.subr.mxu0 0.0
    %243 = vmatpush2.msra.mxu0 0.0
    %244 = vmatprep.subr.mxu0 0.0
    %245 = vmatpush2.msra.mxu0 0.0
    %246 = vmatprep.mubr.f32.mxu0 0.0
    %247 = vmatmul.mubr.f32.gmra.mxu0 %v180
    %v248 = vpop.f32.mrf.mxu0
    %v249 = vadd.f32 %v176, %v248
    %v250 = vpop.f32.mrf.mxu0
    %251 = vdwg.mxu0
    %v252 = vadd.f32 %v249, 3.0
    %v253 = vmax.f32 %v252, 0.0
    %v254 = vmin.f32 %v253, 6.0
    %v255 = vmul.f32 %v254, 0.16666667
    %v256 = vlaneseq
    %v257 = vshrl.u32 %v256, 7
    %v258 = vsub.s32 0, %v257
    %v259 = vrot.slane %v255, %v258
    %261 = vbcast.lane.b32.xlu0 %v259, 256
    %v262 = vpop.permute.xlu0 %261
    %s264 = sor.u32 256, 8
    %265 = vbcast.lane.b32.xlu0 %v259, %s264
    %v266 = vpop.permute.xlu0 %265
    %v267 = vlaneseq
    %v268 = vshrl.u32 %v267, 7
    %v269 = vsub.s32 1, %v268
    %v270 = vrot.slane %v255, %v269
    %272 = vbcast.lane.b32.xlu0 %v270, 256
    %v273 = vpop.permute.xlu0 %272
    %s275 = sor.u32 256, 8
    %276 = vbcast.lane.b32.xlu0 %v270, %s275
    %v277 = vpop.permute.xlu0 %276
    %v278 = vmul.f32 %v35, %v262
    %v279 = vmul.f32 %v36, %v262
    %v280 = vmul.f32 %v37, %v266
    %v281 = vmul.f32 %v38, %v266
    %v282 = vmul.f32 %v39, %v273
    %v283 = vmul.f32 %v40, %v273
    %v284 = vmul.f32 %v41, %v277
    %v285 = vmul.f32 %v42, %v277
    %286 = vst [vmem:[#allocation5] sm:$0xff] %v278
    %287 = vst [vmem:[#allocation5 + $0x8] sm:$0xff] %v279
    %288 = vst [vmem:[#allocation5 + $0x10] sm:$0xff] %v280
    %289 = vst [vmem:[#allocation5 + $0x18] sm:$0xff] %v281
    %290 = vst [vmem:[#allocation5 + $0x20] sm:$0xff] %v282
    %291 = vst [vmem:[#allocation5 + $0x28] sm:$0xff] %v283
    %292 = vst [vmem:[#allocation5 + $0x30] sm:$0xff] %v284
    %293 = vst [vmem:[#allocation5 + $0x38] sm:$0xff] %v285
    // Predicated region
    $region26: #{tpu_custom_call.1} parent=1 // pred_check
      _
    $region27: #{tpu_custom_call.1} parent=1 // pred_check_branch
      %295 = sbr.rel (0) target = $region29
    $region28: #{tpu_custom_call.1} parent=1 // pred_region
      %s297 = ssub.s32 1024, 1024
      %298 = vsyncadd [#allocation4], %s297
      %s299 = sshll.u32 [#allocation5], 4
      %s300 = int_to_ptr.vmem [resolvable:$true] %s299
      %305 = dma.vmem_to_hbm [thread:$0]  %s300, 1024, %s5, [#allocation4], 256, 256, 16
    $region29: #{tpu_custom_call.1} parent=1 // pred_fallthru
      _
    // Predicated region
    $region30: #{tpu_custom_call.1} parent=1 // pred_check
      _
    $region31: #{tpu_custom_call.1} parent=1 // pred_check_branch
      %307 = sbr.rel (0) target = $region33
    $region32: #{tpu_custom_call.1} parent=1 // pred_region
      %308 = dma.done [#allocation4], 1024
    $region33: #{tpu_custom_call.1} parent=1 // pred_fallthru
      _
    %309 = vsyncpa [#allocation3], 1
    %310 = vsyncpa [#allocation4], 1

</llo_original>
